<compile_context>
chip_gen: v5e
topology: v5e:2x2
jax: 0.10.0
libtpu: 0.0.40
codegen_flags: <defaults>
</compile_context>

<pallas_src>
import functools
import math

import jax
import jax.numpy as jnp
from jax.experimental import pallas as pl
from jax.experimental.pallas import tpu as pltpu


def _round_up(n: int, m: int) -> int:
    return ((n + m - 1) // m) * m


def _vmem_capacity_bytes() -> int:
    try:
        return int(pltpu.get_tpu_info().vmem_capacity_bytes)
    except Exception:
        return 64 * 1024 * 1024  # conservative floor (v7x per-TensorCore VMEM)


def _pick_row_tile(rows: int) -> int:
    """Row tile: prefer >=4 grid steps (pipeline depth / 2 per TC on v7x),
    then minimal last-tile waste, then the largest tile."""
    if rows <= 256:
        return min(_round_up(rows, 8), 256)  # tiny problem: one tile
    best_tm, best_key = None, None
    for tm in (512, 256, 128):
        steps = -(-rows // tm)
        waste = steps * tm - rows
        key = (steps < 4, waste, -tm)
        if best_key is None or key < best_key:
            best_key, best_tm = key, tm
    return best_tm


# ---------------------------------------------------------------------------
# Kernels
# ---------------------------------------------------------------------------
def _residual_linear_kernel(x_ref, w_ref, b_ref, o_ref, *, module_factor, input_factor):
    """Resident-weight path. x_ref: (TM, H), w_ref: (H, H) bf16, b_ref: (1, H)."""
    x = x_ref[...]
    # module(x) = x @ W + b   (MXU: bf16 inputs, f32 accumulation)
    y = jnp.dot(x.astype(jnp.bfloat16), w_ref[...],
                preferred_element_type=jnp.float32) + b_ref[...]
    # residual combine in f32 on the VPU
    out = y * module_factor + x.astype(jnp.float32) * input_factor
    o_ref[...] = out.astype(o_ref.dtype)


def _residual_linear_ntiled_kernel(x_ref, xr_ref, w_ref, b_ref, o_ref, *,
                                   module_factor, input_factor):
    """Streamed-weight path (large hidden).
    x_ref: (TM, H) full-K activations (reused across the j axis),
    xr_ref: (TM, TN) residual slab, w_ref: (H, TN) bf16, b_ref: (1, TN)."""
    x = x_ref[...]
    y = jnp.dot(x.astype(jnp.bfloat16), w_ref[...],
                preferred_element_type=jnp.float32) + b_ref[...]
    out = y * module_factor + xr_ref[...].astype(jnp.float32) * input_factor
    o_ref[...] = out.astype(o_ref.dtype)


# ---------------------------------------------------------------------------
# Wrapper
# ---------------------------------------------------------------------------
def residual_connection_forward(x, weight, bias, module_factor=1.0, input_factor=1.0,
                                *, force_ntiled=False):
    """out = (x @ weight + bias) * module_factor + x * input_factor

    x: (..., hidden); weight: (hidden, hidden) — pre-cast to bf16 by the caller
    (cast here only as a fallback); bias: (hidden,).
    """
    orig_shape = x.shape
    hidden = orig_shape[-1]
    rows = math.prod(orig_shape[:-1])
    assert weight.shape == (hidden, hidden) and bias.shape == (hidden,)

    x2d = x.reshape(rows, hidden)
    w = weight if weight.dtype == jnp.bfloat16 else weight.astype(jnp.bfloat16)
    b2d = bias.reshape(1, hidden).astype(jnp.float32)

    mf = float(module_factor)
    in_f = float(input_factor)

    tm = _pick_row_tile(rows)
    vmem_cap = _vmem_capacity_bytes()
    budget = int(vmem_cap * 0.80)  # headroom for compiler internal scratch

    itemsize = x.dtype.itemsize
    w_bytes = hidden * hidden * 2                                # bf16, single-buffered
    io_bytes = lambda t: 2 * (t * hidden * itemsize) * 2         # x + out tiles, double-buffered
    resident_need = w_bytes + io_bytes(tm) + 8 * hidden * 4

    use_ntiled = force_ntiled or (resident_need > budget and hidden % 128 == 0)

    flops = 2 * rows * hidden * hidden + 3 * rows * hidden
    bytes_accessed = 2 * rows * hidden * itemsize + w_bytes + hidden * 4
    cost = pl.CostEstimate(flops=flops, transcendentals=0, bytes_accessed=bytes_accessed)

    if not use_ntiled:
        # Shrink the row tile if a non-128-multiple hidden doesn't fit the budget.
        while resident_need > budget and tm > 8:
            tm = max(8, _round_up(tm // 2, 8))
            resident_need = w_bytes + io_bytes(tm) + 8 * hidden * 4
        # TODO(synk): if the bf16 weight alone exceeds VMEM and hidden is not a
        # multiple of 128, a K-tiled accumulator path would be needed.
        vmem_limit = min(budget, max(32 * 1024 * 1024, int(resident_need * 1.3) + (1 << 20)))
        grid = (pl.cdiv(rows, tm),)

        kernel = functools.partial(_residual_linear_kernel,
                                   module_factor=mf, input_factor=in_f)
        out2d = pl.pallas_call(
            kernel,
            out_shape=jax.ShapeDtypeStruct((rows, hidden), x.dtype),
            grid_spec=pl.GridSpec(
                grid=grid,
                in_specs=[
                    # x row tile (auto double-buffered pipeline)
                    pl.BlockSpec((tm, hidden), lambda i: (i, 0)),
                    # weight + bias: constant index -> VMEM-resident, single-buffered
                    pl.BlockSpec((hidden, hidden), lambda i: (0, 0),
                                 pipeline_mode=pl.Buffered(1)),
                    pl.BlockSpec((1, hidden), lambda i: (0, 0),
                                 pipeline_mode=pl.Buffered(1)),
                ],
                out_specs=pl.BlockSpec((tm, hidden), lambda i: (i, 0)),
            ),
            compiler_params=pltpu.CompilerParams(
                dimension_semantics=("parallel",),
                vmem_limit_bytes=vmem_limit,
            ),
            cost_estimate=cost,
        )(x2d, w, b2d)
    else:
        # Streamed-weight path: only an (H, tn) weight slab is resident at a time.
        tn = 256 if (hidden % 256 == 0 and hidden >= 512) else 128
        assert hidden % tn == 0
        grid = (pl.cdiv(rows, tm), hidden // tn)

        ntiled_need = (2 * tm * hidden * itemsize      # x full-K tile (reused across j)
                       + 2 * tm * tn * itemsize        # x residual slab
                       + 2 * hidden * tn * 2           # streamed weight slab (bf16)
                       + 2 * 8 * tn * 4                # bias slab
                       + 2 * tm * tn * itemsize)       # out slab
        vmem_limit = min(budget, max(32 * 1024 * 1024, int(ntiled_need * 1.3) + (1 << 20)))

        kernel = functools.partial(_residual_linear_ntiled_kernel,
                                   module_factor=mf, input_factor=in_f)
        out2d = pl.pallas_call(
            kernel,
            out_shape=jax.ShapeDtypeStruct((rows, hidden), x.dtype),
            grid_spec=pl.GridSpec(
                grid=grid,
                in_specs=[
                    pl.BlockSpec((tm, hidden), lambda i, j: (i, 0)),   # x (full K, matmul)
                    pl.BlockSpec((tm, tn), lambda i, j: (i, j)),       # x residual slab
                    pl.BlockSpec((hidden, tn), lambda i, j: (0, j)),   # weight slab (streamed)
                    pl.BlockSpec((1, tn), lambda i, j: (0, j)),        # bias slab
                ],
                out_specs=pl.BlockSpec((tm, tn), lambda i, j: (i, j)),
            ),
            compiler_params=pltpu.CompilerParams(
                dimension_semantics=("parallel", "parallel"),
                vmem_limit_bytes=vmem_limit,
            ),
            cost_estimate=cost,
        )(x2d, x2d, w, b2d)

    return out2d.reshape(orig_shape)


if __name__ == "__main__":
    # Small shapes: batch=2, seq=8, hidden=32 (resident-weight path, unpadded 32-wide lanes)
    batch, seq, hidden = 2, 8, 32
    module_factor, input_factor = 0.5, 1.0

    key = jax.random.PRNGKey(0)
    kx, kw, kb = jax.random.split(key, 3)
    x = jax.random.normal(kx, (batch, seq, hidden), dtype=jnp.float32)
    weight = jax.random.normal(kw, (hidden, hidden), dtype=jnp.float32) * 0.02
    bias = jax.random.normal(kb, (hidden,), dtype=jnp.float32) * 0.02
    w_bf16 = weight.astype(jnp.bfloat16)  # pre-cast once, outside the per-call path

    out = residual_connection_forward(x, w_bf16, bias, module_factor, input_factor)
    jax.block_until_ready(out)

    # Pure-JAX f32 reference (tolerance relaxed for bf16 MXU inputs; residual path is f32).
    ref = (x @ weight + bias) * module_factor + x * input_factor
    assert out.shape == x.shape
    assert jnp.allclose(out, ref, atol=1e-2, rtol=1e-2), "mismatch vs reference (resident path)"

    # Also exercise the N-tiled streamed-weight path used for large hidden on v7x.
    h2 = 512
    kx2, kw2, kb2 = jax.random.split(jax.random.PRNGKey(1), 3)
    x2 = jax.random.normal(kx2, (2, 8, h2), dtype=jnp.float32)
    w2 = jax.random.normal(kw2, (h2, h2), dtype=jnp.float32) * 0.02
    b2 = jax.random.normal(kb2, (h2,), dtype=jnp.float32) * 0.02
    out2 = residual_connection_forward(x2, w2.astype(jnp.bfloat16), b2,
                                       module_factor, input_factor, force_ntiled=True)
    jax.block_until_ready(out2)
    ref2 = (x2 @ w2 + b2) * module_factor + x2 * input_factor
    assert jnp.allclose(out2, ref2, atol=2e-2, rtol=2e-2), "mismatch vs reference (n-tiled path)"

    print("KERNEL_OK")
</pallas_src>

<mosaic_0001>
module attributes {stable_mosaic.version = 11 : i64} {
  func.func @_residual_linear_kernel(%arg0: i32, %arg1: memref<16x32xf32, #tpu.memory_space<vmem>>, %arg2: memref<32x32xbf16, #tpu.memory_space<vmem>>, %arg3: memref<1x32xf32, #tpu.memory_space<vmem>>, %arg4: memref<16x32xf32, #tpu.memory_space<vmem>>) attributes {dimension_semantics = [#tpu.dimension_semantics<parallel>], iteration_bounds = array<i64: 1>, scalar_prefetch = 0 : i64, scratch_operands = 0 : i64, tpu.core_type = #tpu.core_type<tc>, window_params = [{transform_indices = @transform_0, window_bounds = array<i64: 16, 32>}, {pipeline_mode = #tpu.pipeline_mode<synchronous>, transform_indices = @transform_1, window_bounds = array<i64: 32, 32>}, {pipeline_mode = #tpu.pipeline_mode<synchronous>, transform_indices = @transform_2, window_bounds = array<i64: 1, 32>}, {transform_indices = @transform_3, window_bounds = array<i64: 16, 32>}]} {
    %c0 = arith.constant 0 : index
    %c0_0 = arith.constant 0 : index
    %0 = vector.load %arg1[%c0, %c0_0] : memref<16x32xf32, #tpu.memory_space<vmem>>, vector<16x32xf32>
    %1 = arith.truncf %0 : vector<16x32xf32> to vector<16x32xbf16>
    %c0_1 = arith.constant 0 : index
    %c0_2 = arith.constant 0 : index
    %2 = vector.load %arg2[%c0_1, %c0_2] : memref<32x32xbf16, #tpu.memory_space<vmem>>, vector<32x32xbf16>
    %cst = arith.constant dense<0.000000e+00> : vector<16x32xf32>
    %3 = tpu.matmul %1, %2, %cst {dimension_numbers = #tpu.dot_dimension_numbers<[1], [0], [0], [1], [0, 0, 1, 1], [], []>} : vector<16x32xbf16>, vector<32x32xbf16>, vector<16x32xf32> -> vector<16x32xf32>
    %c0_3 = arith.constant 0 : index
    %c0_4 = arith.constant 0 : index
    %4 = vector.load %arg3[%c0_3, %c0_4] : memref<1x32xf32, #tpu.memory_space<vmem>>, vector<1x32xf32>
    %5 = vector.broadcast %4 : vector<1x32xf32> to vector<16x32xf32>
    %6 = arith.addf %3, %5 : vector<16x32xf32>
    %cst_5 = arith.constant 5.000000e-01 : f32
    %7 = vector.broadcast %cst_5 : f32 to vector<16x32xf32>
    %8 = arith.mulf %6, %7 : vector<16x32xf32>
    %cst_6 = arith.constant 1.000000e+00 : f32
    %9 = vector.broadcast %cst_6 : f32 to vector<16x32xf32>
    %10 = arith.mulf %0, %9 : vector<16x32xf32>
    %11 = arith.addf %8, %10 : vector<16x32xf32>
    %c0_7 = arith.constant 0 : index
    %c0_8 = arith.constant 0 : index
    %12 = vector.load %arg4[%c0_7, %c0_8] : memref<16x32xf32, #tpu.memory_space<vmem>>, vector<16x32xf32>
    tpu.vector_store %arg4[%c0_7, %c0_8], %11 {strides = array<i32>} : memref<16x32xf32, #tpu.memory_space<vmem>>, vector<16x32xf32>,
    return
  }
  func.func @transform_0(%arg0: i32) -> (i32, i32) {
    %c0_i32 = arith.constant 0 : i32
    %c0_i32_0 = arith.constant 0 : i32
    return %arg0, %c0_i32 : i32, i32
  }
  func.func @transform_1(%arg0: i32) -> (i32, i32) {
    %c0_i32 = arith.constant 0 : i32
    %c0_i32_0 = arith.constant 0 : i32
    %c0_i32_1 = arith.constant 0 : i32
    return %c0_i32, %c0_i32_0 : i32, i32
  }
  func.func @transform_2(%arg0: i32) -> (i32, i32) {
    %c0_i32 = arith.constant 0 : i32
    %c0_i32_0 = arith.constant 0 : i32
    %c0_i32_1 = arith.constant 0 : i32
    return %c0_i32, %c0_i32_0 : i32, i32
  }
  func.func @transform_3(%arg0: i32) -> (i32, i32) {
    %c0_i32 = arith.constant 0 : i32
    %c0_i32_0 = arith.constant 0 : i32
    return %arg0, %c0_i32 : i32, i32
  }
}

</mosaic_0001>

<llo_original>
// kernel: tpu_custom_call.1
$region0: #{tpu_custom_call.1}
  #allocation0 [shape = 'u32[]', space=smem, size = 0x4, offset = 0x4, fixed_abs, tag = 'smem constant byte address 0x4 - core index']
  #allocation1 [shape = 'u32[72,128]{1,0:T(1,128)}', space=vmem, size = 0x9000, scoped, tag = 'internal scratch']
  %s0 = inlined_call_operand.hbm [shape: f32[16,32], index: 0, kind: input, shape index: {}]
  %s1 = inlined_call_operand.hbm [shape: bf16[32,32], index: 1, kind: input, shape index: {}]
  %s2 = inlined_call_operand.vmem [shape: f32[1,32], index: 2, kind: input, shape index: {}]
  %s3 = inlined_call_operand.hbm [shape: f32[16,32], index: 3, kind: output, shape index: {}]
  %s4 = sld [smem:[#allocation0]]
  $region30: #{tpu_custom_call.1} parent=0
    _
  %s6 = ssub.s32 1, %s4
  %s7 = scalar_select 0, %s6, %s4
  $region1: #{tpu_custom_call.1} parent=0
    #allocation2 [shape = 'u8[8192]{0}', space=vmem, size = 0x2000, scoped, tag = 'input window, operand 0, single buffered']
    #allocation3 [shape = 's32[1]{0}', space=sflag, size = 0x4, scoped, tag = 'scoped memory for tpu_custom_call.1']
    #allocation4 [shape = 's32[1]{0}', space=sflag, size = 0x4, scoped, tag = 'scoped memory for tpu_custom_call.1']
    #allocation5 [shape = 'u8[8192]{0}', space=vmem, size = 0x2000, scoped, tag = 'input window, operand 1, single buffered']
    #allocation6 [shape = 's32[1]{0}', space=sflag, size = 0x4, scoped, tag = 'scoped memory for tpu_custom_call.1']
    #allocation7 [shape = 'u8[8192]{0}', space=vmem, size = 0x2000, scoped, tag = 'output window, operand 0, single buffered']
    %8 = vsyncpa [#allocation3], 0
    %9 = vsyncpa [#allocation6], 0
    %10 = vsyncpa [#allocation4], 0
    // Predicated region
    $region2: #{tpu_custom_call.1} parent=1 // pred_check
      _
    $region3: #{tpu_custom_call.1} parent=1 // pred_check_branch
      %12 = sbr.rel (0) target = $region5
    $region4: #{tpu_custom_call.1} parent=1 // pred_region
      %14 = vsyncadd [#allocation3], 0
      %s15 = sshll.u32 %s0, 4
      %s16 = int_to_ptr.hbm [resolvable:$true] %s15
      %s17 = sshll.u32 [#allocation2], 4
      %s18 = int_to_ptr.vmem [resolvable:$true] %s17
      %23 = dma.hbm_to_vmem [thread:$0]  %s16, 256, %s18, [#allocation3], 128, 128, 8
    $region5: #{tpu_custom_call.1} parent=1 // pred_fallthru
      _
    // Predicated region
    $region6: #{tpu_custom_call.1} parent=1 // pred_check
      _
    $region7: #{tpu_custom_call.1} parent=1 // pred_check_branch
      %25 = sbr.rel (0) target = $region9
    $region8: #{tpu_custom_call.1} parent=1 // pred_region
      %27 = vsyncadd [#allocation6], 0
      %s28 = sshll.u32 %s1, 4
      %s29 = int_to_ptr.hbm [resolvable:$true] %s28
      %s30 = sshll.u32 [#allocation5], 4
      %s31 = int_to_ptr.vmem [resolvable:$true] %s30
      %36 = dma.hbm_to_vmem [thread:$0]  %s29, 256, %s31, [#allocation6], 64, 64, 4
    $region9: #{tpu_custom_call.1} parent=1 // pred_fallthru
      _
    // Predicated region
    $region10: #{tpu_custom_call.1} parent=1 // pred_check
      _
    $region11: #{tpu_custom_call.1} parent=1 // pred_check_branch
      %38 = sbr.rel (0) target = $region13
    $region12: #{tpu_custom_call.1} parent=1 // pred_region
      _
    $region13: #{tpu_custom_call.1} parent=1 // pred_fallthru
      _
    // Predicated region
    $region14: #{tpu_custom_call.1} parent=1 // pred_check
      _
    $region15: #{tpu_custom_call.1} parent=1 // pred_check_branch
      %40 = sbr.rel (0) target = $region17
    $region16: #{tpu_custom_call.1} parent=1 // pred_region
      %42 = dma.done [#allocation3], 256
    $region17: #{tpu_custom_call.1} parent=1 // pred_fallthru
      _
    // Predicated region
    $region18: #{tpu_custom_call.1} parent=1 // pred_check
      _
    $region19: #{tpu_custom_call.1} parent=1 // pred_check_branch
      %44 = sbr.rel (0) target = $region21
    $region20: #{tpu_custom_call.1} parent=1 // pred_region
      %46 = dma.done [#allocation6], 256
    $region21: #{tpu_custom_call.1} parent=1 // pred_fallthru
      _
    %v48 = vld [vmem:[#allocation2] sm:$0xff]
    %v49 = vld [vmem:[#allocation2 + $0x8] sm:$0xff]
    %v50 = vpack.c.bf16 %v49, %v48
    %v51 = vld [vmem:[#allocation5] sm:$0xf]
    %v52 = vld [vmem:[#allocation5 + $0x4] sm:$0xf]
    %v53 = vld [vmem:[#allocation5 + $0x8] sm:$0xf]
    %v54 = vld [vmem:[#allocation5 + $0xc] sm:$0xf]
    %v55 = vld [vmem:[%s2] sm:$0x1]
    %v57 = vperm.slane %v55, 0
    %v63 = vunpack.c.l.b16 %v51
    %v64 = vunpack.c.l.b16 %v52
    %v65 = vunpack.c.l.b16 %v53
    %v66 = vunpack.c.l.b16 %v54
    %v67 = vpack.c.b16 %v64, %v63
    %v68 = vpack.c.b16 %v66, %v65
    %vm71 = vcmask 261120
    %v73 = vsel %vm71, %v50, 0
    %75 = vmatpush.bf16.msra.mxu0 0
    %76 = vmatpush.bf16.msra.mxu0 0
    %77 = vmatpush.bf16.msra.mxu0 0
    %78 = vmatpush.bf16.msra.mxu0 0
    %79 = vmatpush.bf16.msra.mxu0 0
    %80 = vmatpush.bf16.msra.mxu0 0
    %81 = vmatpush.bf16.msra.mxu0 %v68
    %82 = vmatpush.bf16.msra.mxu0 %v67
    %83 = vmatmul.bf16.gmra.mxu0 %v73
    %v84 = vpop.f32.mrf.mxu0
    %v85 = vadd.f32 %v57, %v84
    %v86 = vpop.f32.mrf.mxu0
    %v87 = vadd.f32 %v57, %v86
    %88 = vdwg.mxu0
    %v89 = vmul.f32 %v85, 0.5
    %v90 = vmul.f32 %v87, 0.5
    %v91 = vadd.f32 %v89, %v48
    %v92 = vadd.f32 %v90, %v49
    %93 = vst.msk [vmem:[#allocation7] sm:$0xff] %vm71, %v91
    %94 = vst.msk [vmem:[#allocation7 + $0x8] sm:$0xff] %vm71, %v92
    // Predicated region
    $region22: #{tpu_custom_call.1} parent=1 // pred_check
      _
    $region23: #{tpu_custom_call.1} parent=1 // pred_check_branch
      %96 = sbr.rel (0) target = $region25
    $region24: #{tpu_custom_call.1} parent=1 // pred_region
      %98 = vsyncadd [#allocation4], 0
      %s99 = sshll.u32 [#allocation7], 4
      %s100 = int_to_ptr.vmem [resolvable:$true] %s99
      %s101 = sshll.u32 %s3, 4
      %s102 = int_to_ptr.hbm [resolvable:$true] %s101
      %107 = dma.vmem_to_hbm [thread:$0]  %s100, 256, %s102, [#allocation4], 128, 128, 8
    $region25: #{tpu_custom_call.1} parent=1 // pred_fallthru
      _
    // Predicated region
    $region26: #{tpu_custom_call.1} parent=1 // pred_check
      _
    $region27: #{tpu_custom_call.1} parent=1 // pred_check_branch
      %109 = sbr.rel (0) target = $region29
    $region28: #{tpu_custom_call.1} parent=1 // pred_region
      %111 = dma.done [#allocation4], 256
    $region29: #{tpu_custom_call.1} parent=1 // pred_fallthru
      _
    %112 = vsyncpa [#allocation3], 1
    %113 = vsyncpa [#allocation6], 1
    %114 = vsyncpa [#allocation4], 1

</llo_original>
